<compile_context>
chip_gen: v5e
topology: v5e:2x2
jax: 0.10.0
libtpu: 0.0.40
codegen_flags: <defaults>
</compile_context>

<pallas_src>
import jax
import jax.numpy as jnp
from jax import lax
from jax.experimental import pallas as pl
from jax.experimental.pallas import tpu as pltpu


# ---------------------------------------------------------------------------
# Pallas kernel: one (batch, row-tile) step of the bottleneck block.
# ---------------------------------------------------------------------------
def _bottleneck_kernel(x_ref, w1_ref, b1_ref, w2_ref, b2_ref, w3_ref, b3_ref,
                       o_ref):
    _, H, W, Cin = x_ref.shape
    _, Ht, _, Cout = o_ref.shape
    Cmid = w1_ref.shape[1]

    h = pl.program_id(1)
    n_ht = pl.num_programs(1)
    row0 = pl.multiple_of(h * Ht, Ht)                 # first core row of tile

    # ---- gather the row tile + 1-row halo (clamped; masked after conv1) ----
    top_idx = jnp.maximum(row0 - 1, 0)
    bot_idx = jnp.minimum(row0 + Ht, H - 1)
    x_top = x_ref[0, pl.ds(top_idx, 1), :, :]                 # (1,  W, Cin) f32
    x_core = x_ref[0, pl.ds(row0, Ht), :, :]                  # (Ht, W, Cin) f32
    x_bot = x_ref[0, pl.ds(bot_idx, 1), :, :]                 # (1,  W, Cin) f32
    x_ext = jnp.concatenate([x_top, x_core, x_bot], axis=0)   # (Ht+2, W, Cin)

    # ---- conv1 (1x1, BN1 folded into w1) + bias + relu ----------------------
    xe = x_ext.reshape((Ht + 2) * W, Cin).astype(jnp.bfloat16)
    t1 = jnp.dot(xe, w1_ref[...], preferred_element_type=jnp.float32)
    t1 = jnp.maximum(t1 + b1_ref[...], 0.0).reshape(Ht + 2, W, Cmid)

    # Zero halo rows that fall outside the image (the 3x3 zero padding).
    row_ids = lax.broadcasted_iota(jnp.int32, (Ht + 2, W, Cmid), 0)
    pad_top = jnp.logical_and(row_ids == 0, h == 0)
    pad_bot = jnp.logical_and(row_ids == Ht + 1, h == n_ht - 1)
    t1 = jnp.where(jnp.logical_or(pad_top, pad_bot), 0.0, t1)

    # ---- conv2 (3x3, stride 1, pad 1) ---------------------------------------
    # W-halo: two shifted copies via pltpu.roll (XLU slot) + iota boundary
    # mask, shared by all three dy groups.  Taps fed to the MXU are bf16.
    col_ids = lax.broadcasted_iota(jnp.int32, (Ht + 2, W, Cmid), 1)
    t_left = jnp.where(col_ids == 0, 0.0, pltpu.roll(t1, 1, 1))           # dx=0
    t_right = jnp.where(col_ids == W - 1, 0.0, pltpu.roll(t1, W - 1, 1))  # dx=2

    c_l = t_left.astype(jnp.bfloat16)
    c_c = t1.astype(jnp.bfloat16)
    c_r = t_right.astype(jnp.bfloat16)

    M = Ht * W
    if Cmid % 128 == 0:
        # Lane-aligned taps: one fused matmul, K = 9*Cmid (fills v6e/v7x MXU).
        taps = []
        for dy in range(3):
            taps.extend([c_l[dy:dy + Ht], c_c[dy:dy + Ht], c_r[dy:dy + Ht]])
        col = jnp.concatenate(taps, axis=2).reshape(M, 9 * Cmid)
        t2 = jnp.dot(col, w2_ref[...], preferred_element_type=jnp.float32)
    else:
        # Narrow Cmid: per-dy groups (K = 3*Cmid) accumulated in f32 — avoids
        # keeping all 9 lane-misaligned taps live at once.
        w2 = w2_ref[...]
        t2 = None
        for dy in range(3):
            g = jnp.concatenate(
                [c_l[dy:dy + Ht], c_c[dy:dy + Ht], c_r[dy:dy + Ht]], axis=2)
            part = jnp.dot(g.reshape(M, 3 * Cmid),
                           w2[dy * 3 * Cmid:(dy + 1) * 3 * Cmid, :],
                           preferred_element_type=jnp.float32)
            t2 = part if t2 is None else t2 + part
    t2 = jnp.maximum(t2 + b2_ref[...], 0.0).astype(jnp.bfloat16)

    # ---- conv3 (1x1) + bias + exact f32 identity residual + relu ------------
    t3 = jnp.dot(t2, w3_ref[...], preferred_element_type=jnp.float32)
    t3 = t3 + b3_ref[...] + x_core.reshape(M, Cin)
    o_ref[0] = jnp.maximum(t3, 0.0).reshape(Ht, W, Cout).astype(o_ref.dtype)


# ---------------------------------------------------------------------------
# Wrappers.
# ---------------------------------------------------------------------------
def _default_row_tile(H, W):
    # Smallest divisor of H whose tile gives the MXU a reasonable M (>= 256
    # rows); falls back to the full height for small images.
    for rt in range(1, H + 1):
        if H % rt == 0 and rt * W >= 256:
            return rt
    return H


def bottleneck_forward_nhwc(x_nhwc, w1, b1, w2, b2, w3, b3, *, row_tile=None):
    """NHWC entry point (preferred: no layout transposes)."""
    N, H, W, Cin = x_nhwc.shape
    Cmid = w1.shape[1]
    Cout = w3.shape[1]
    if Cin != Cout:
        raise ValueError(
            "Identity shortcut requires in_channel == out_channel * 4; "
            "the downsample branch is not implemented.")
    if row_tile is None:
        row_tile = _default_row_tile(H, W)
    if H % row_tile != 0:
        raise ValueError("row_tile must divide H")
    n_ht = H // row_tile

    full = lambda *shape: pl.BlockSpec(shape, lambda n, h: (0,) * len(shape))

    return pl.pallas_call(
        _bottleneck_kernel,
        out_shape=jax.ShapeDtypeStruct((N, H, W, Cout), jnp.bfloat16),
        grid_spec=pltpu.PrefetchScalarGridSpec(
            num_scalar_prefetch=0,
            grid=(N, n_ht),
            in_specs=[
                # Full image stays VMEM-resident across the h tiles (block
                # index constant over h => no re-fetch); the conv2/conv3
                # intermediates scale with row_tile.
                pl.BlockSpec((1, H, W, Cin), lambda n, h: (n, 0, 0, 0)),
                full(Cin, Cmid), full(1, Cmid),          # w1 (BN folded), b1
                full(9 * Cmid, Cmid), full(1, Cmid),     # w2 (im2col layout), b2
                full(Cmid, Cout), full(1, Cout),         # w3 (BN folded), b3
            ],
            out_specs=pl.BlockSpec((1, row_tile, W, Cout),
                                   lambda n, h: (n, h, 0, 0)),
        ),
        compiler_params=pltpu.CompilerParams(
            dimension_semantics=("parallel", "arbitrary"),
            vmem_limit_bytes=64 * 1024 * 1024),
    )(x_nhwc.astype(jnp.float32), w1, b1, w2, b2, w3, b3)


def _bottleneck_forward_nchw(x_nchw, w1, b1, w2, b2, w3, b3, row_tile=None):
    """NCHW wrapper matching the PyTorch module calling convention."""
    # NOTE: these transposes are pure layout plumbing for API compatibility;
    # keep activations NHWC end-to-end in real pipelines to avoid them.
    x_nhwc = jnp.transpose(x_nchw, (0, 2, 3, 1))
    y = bottleneck_forward_nhwc(x_nhwc, w1, b1, w2, b2, w3, b3,
                                row_tile=row_tile)
    return jnp.transpose(y, (0, 3, 1, 2))


bottleneck_forward = jax.jit(_bottleneck_forward_nchw,
                             static_argnames=("row_tile",))


# ---------------------------------------------------------------------------
# Parameter construction (PyTorch layouts) + BN folding into kernel weights.
# ---------------------------------------------------------------------------
def make_params(key, in_channel, out_channel):
    expansion = 4
    cmid, cout = out_channel, out_channel * expansion
    ks = jax.random.split(key, 15)

    w1 = 0.1 * jax.random.normal(ks[0], (cmid, in_channel, 1, 1), jnp.float32)
    w2 = 0.1 * jax.random.normal(ks[1], (cmid, cmid, 3, 3), jnp.float32)
    w3 = 0.1 * jax.random.normal(ks[2], (cout, cmid, 1, 1), jnp.float32)

    def bn(kg, kb, km, kv, c):
        gamma = 1.0 + 0.1 * jax.random.normal(kg, (c,), jnp.float32)
        beta = 0.1 * jax.random.normal(kb, (c,), jnp.float32)
        rmean = 0.1 * jax.random.normal(km, (c,), jnp.float32)
        rvar = jnp.abs(1.0 + 0.1 * jax.random.normal(kv, (c,), jnp.float32))
        return (gamma, beta, rmean, rvar)

    bn1 = bn(ks[3], ks[4], ks[5], ks[6], cmid)
    bn2 = bn(ks[7], ks[8], ks[9], ks[10], cmid)
    bn3 = bn(ks[11], ks[12], ks[13], ks[14], cout)
    return (w1, bn1, w2, bn2, w3, bn3)


def fold_params(torch_like, eps=1e-5):
    """Fold eval-mode BN into the conv weights; cast weights to bf16."""
    w1_oihw, bn1, w2_oihw, bn2, w3_oihw, bn3 = torch_like

    def scale_bias(p):
        gamma, beta, rmean, rvar = p
        s = gamma / jnp.sqrt(rvar + eps)
        return s, beta - rmean * s

    s1, b1 = scale_bias(bn1)
    s2, b2 = scale_bias(bn2)
    s3, b3 = scale_bias(bn3)

    cmid = w2_oihw.shape[0]
    w1 = jnp.transpose(w1_oihw[:, :, 0, 0], (1, 0)) * s1[None, :]          # (Cin, Cmid)
    w2 = jnp.transpose(w2_oihw, (2, 3, 1, 0)) * s2[None, None, None, :]    # (3,3,Ci,Co)
    w2 = w2.reshape(9 * cmid, cmid)                                        # im2col layout
    w3 = jnp.transpose(w3_oihw[:, :, 0, 0], (1, 0)) * s3[None, :]          # (Cmid, Cout)

    return (w1.astype(jnp.bfloat16), b1[None, :].astype(jnp.float32),
            w2.astype(jnp.bfloat16), b2[None, :].astype(jnp.float32),
            w3.astype(jnp.bfloat16), b3[None, :].astype(jnp.float32))


# ---------------------------------------------------------------------------
# References for verification.
# ---------------------------------------------------------------------------
def reference_forward(x, torch_like, eps=1e-5):
    """Exact f32 PyTorch-semantics reference (eval-mode BN), NCHW."""
    w1, bn1, w2, bn2, w3, bn3 = torch_like
    hi = jax.lax.Precision.HIGHEST

    def conv(x, w, stride, pad):
        return jax.lax.conv_general_dilated(
            x, w, (stride, stride), [(pad, pad), (pad, pad)],
            dimension_numbers=("NCHW", "OIHW", "NCHW"), precision=hi)

    def bn(x, p):
        gamma, beta, rmean, rvar = p
        sh = (1, -1, 1, 1)
        return (x - rmean.reshape(sh)) / jnp.sqrt(rvar.reshape(sh) + eps) \
            * gamma.reshape(sh) + beta.reshape(sh)

    identity = x
    out = jax.nn.relu(bn(conv(x, w1, 1, 0), bn1))
    out = jax.nn.relu(bn(conv(out, w2, 1, 1), bn2))
    out = bn(conv(out, w3, 1, 0), bn3)
    return jax.nn.relu(out + identity)


def emulated_reference(x_nchw, kernel_params):
    """Plain-JAX emulation of the kernel's bf16-MXU / f32-accumulate math."""
    w1, b1, w2, b2, w3, b3 = kernel_params
    f32 = jnp.float32
    hi = jax.lax.Precision.HIGHEST
    x = jnp.transpose(x_nchw, (0, 2, 3, 1)).astype(f32)          # NHWC, f32
    N, H, W, Cin = x.shape
    Cmid = w1.shape[1]

    xq = x.reshape(N, H * W, Cin).astype(jnp.bfloat16).astype(f32)
    t1 = jnp.einsum("npk,kc->npc", xq, w1.astype(f32), precision=hi) + b1
    t1 = jnp.maximum(t1, 0.0).reshape(N, H, W, Cmid)

    pad = jnp.pad(t1, ((0, 0), (1, 1), (1, 1), (0, 0)))
    taps = [pad[:, dy:dy + H, dx:dx + W, :].reshape(N, H * W, Cmid)
            for dy in range(3) for dx in range(3)]
    col = jnp.concatenate(taps, axis=-1).astype(jnp.bfloat16).astype(f32)

    t2 = jnp.einsum("npk,kc->npc", col, w2.astype(f32), precision=hi) + b2
    t2 = jnp.maximum(t2, 0.0).astype(jnp.bfloat16).astype(f32)

    t3 = jnp.einsum("npk,kc->npc", t2, w3.astype(f32), precision=hi) + b3
    t3 = t3 + x.reshape(N, H * W, Cin)
    y = jnp.maximum(t3, 0.0).reshape(N, H, W, -1).astype(jnp.bfloat16)
    return jnp.transpose(y, (0, 3, 1, 2))


# ---------------------------------------------------------------------------
# Demo / check.
# ---------------------------------------------------------------------------
if __name__ == "__main__":
    key = jax.random.PRNGKey(0)

    # (N, H, W, out_channel, row_tile):
    #   config 0: Cmid=32  -> per-dy (K=3*Cmid) conv2 path, two row tiles.
    #   config 1: Cmid=128 -> fused (K=9*Cmid) conv2 path, single row tile.
    # Both keep Cout = 4*out_channel lane-dense (>=128) for unmasked stores.
    configs = [(2, 8, 8, 32, 4), (1, 8, 8, 128, 8)]

    for cfg_idx, (N, H, W, out_channel, row_tile) in enumerate(configs):
        key, k_x, k_p = jax.random.split(key, 3)
        in_channel = out_channel * 4          # identity shortcut: Cin == Cout

        x = jax.random.normal(k_x, (N, in_channel, H, W), jnp.float32)
        torch_like = make_params(k_p, in_channel, out_channel)
        kernel_params = fold_params(torch_like)

        y = bottleneck_forward(x, *kernel_params, row_tile=row_tile)
        y = jax.block_until_ready(y)
        assert y.shape == (N, in_channel, H, W)
        assert y.dtype == jnp.bfloat16
        yf = y.astype(jnp.float32)

        # (1) Tight-ish check vs a plain-JAX emulation of the kernel's bf16 math.
        y_emu = emulated_reference(x, kernel_params).astype(jnp.float32)
        # (2) Loose check vs the exact f32 PyTorch-semantics reference
        #     (tolerance dominated by the intentional bf16 weight/activation
        #     casts and the bf16 output).
        y_ref = reference_forward(x, torch_like)

        scale = 1.0 + float(jnp.max(jnp.abs(y_ref)))
        err_emu = float(jnp.max(jnp.abs(yf - y_emu)))
        err_ref = float(jnp.max(jnp.abs(yf - y_ref)))
        assert err_emu < 0.03 * scale, (
            f"cfg {cfg_idx}: bf16-emulation mismatch err={err_emu} scale={scale}")
        assert err_ref < 0.08 * scale, (
            f"cfg {cfg_idx}: f32 reference mismatch err={err_ref} scale={scale}")

    print("KERNEL_OK")
</pallas_src>

<mosaic_0001>
module attributes {stable_mosaic.version = 11 : i64} {
  func.func @_bottleneck_kernel(%arg0: i32, %arg1: i32, %arg2: memref<1x8x8x128xf32, #tpu.memory_space<vmem>>, %arg3: memref<128x32xbf16, #tpu.memory_space<vmem>>, %arg4: memref<1x32xf32, #tpu.memory_space<vmem>>, %arg5: memref<288x32xbf16, #tpu.memory_space<vmem>>, %arg6: memref<1x32xf32, #tpu.memory_space<vmem>>, %arg7: memref<32x128xbf16, #tpu.memory_space<vmem>>, %arg8: memref<1x128xf32, #tpu.memory_space<vmem>>, %arg9: memref<1x4x8x128xbf16, #tpu.memory_space<vmem>>) attributes {dimension_semantics = [#tpu.dimension_semantics<parallel>, #tpu.dimension_semantics<arbitrary>], iteration_bounds = array<i64: 2, 2>, scalar_prefetch = 0 : i64, scratch_operands = 0 : i64, tpu.core_type = #tpu.core_type<tc>, window_params = [{transform_indices = @transform_0, window_bounds = array<i64: 1, 8, 8, 128>}, {pipeline_mode = #tpu.pipeline_mode<synchronous>, transform_indices = @transform_1, window_bounds = array<i64: 128, 32>}, {pipeline_mode = #tpu.pipeline_mode<synchronous>, transform_indices = @transform_2, window_bounds = array<i64: 1, 32>}, {pipeline_mode = #tpu.pipeline_mode<synchronous>, transform_indices = @transform_3, window_bounds = array<i64: 288, 32>}, {pipeline_mode = #tpu.pipeline_mode<synchronous>, transform_indices = @transform_4, window_bounds = array<i64: 1, 32>}, {pipeline_mode = #tpu.pipeline_mode<synchronous>, transform_indices = @transform_5, window_bounds = array<i64: 32, 128>}, {pipeline_mode = #tpu.pipeline_mode<synchronous>, transform_indices = @transform_6, window_bounds = array<i64: 1, 128>}, {transform_indices = @transform_7, window_bounds = array<i64: 1, 4, 8, 128>}]} {
    %c4_i32 = arith.constant 4 : i32
    %0 = arith.muli %arg1, %c4_i32 : i32
    %1 = tpu.assume_multiple %0, 4 : i32
    %c1_i32 = arith.constant 1 : i32
    %2 = arith.subi %1, %c1_i32 : i32
    %c0_i32 = arith.constant 0 : i32
    %3 = arith.maxsi %2, %c0_i32 : i32
    %c4_i32_0 = arith.constant 4 : i32
    %4 = arith.addi %1, %c4_i32_0 : i32
    %c7_i32 = arith.constant 7 : i32
    %5 = arith.minsi %4, %c7_i32 : i32
    %c0 = arith.constant 0 : index
    %6 = arith.index_cast %3 : i32 to index
    %c0_1 = arith.constant 0 : index
    %c0_2 = arith.constant 0 : index
    %7 = vector.load %arg2[%c0, %6, %c0_1, %c0_2] : memref<1x8x8x128xf32, #tpu.memory_space<vmem>>, vector<1x1x8x128xf32>
    %8 = vector.shape_cast %7 : vector<1x1x8x128xf32> to vector<1x8x128xf32>
    %c0_3 = arith.constant 0 : index
    %9 = arith.index_cast %1 : i32 to index
    %c0_4 = arith.constant 0 : index
    %c0_5 = arith.constant 0 : index
    %10 = vector.load %arg2[%c0_3, %9, %c0_4, %c0_5] : memref<1x8x8x128xf32, #tpu.memory_space<vmem>>, vector<1x4x8x128xf32>
    %11 = vector.shape_cast %10 : vector<1x4x8x128xf32> to vector<4x8x128xf32>
    %c0_6 = arith.constant 0 : index
    %12 = arith.index_cast %5 : i32 to index
    %c0_7 = arith.constant 0 : index
    %c0_8 = arith.constant 0 : index
    %13 = vector.load %arg2[%c0_6, %12, %c0_7, %c0_8] : memref<1x8x8x128xf32, #tpu.memory_space<vmem>>, vector<1x1x8x128xf32>
    %14 = vector.shape_cast %13 : vector<1x1x8x128xf32> to vector<1x8x128xf32>
    %15 = tpu.concatenate %8, %11, %14 in 0 : vector<1x8x128xf32>, vector<4x8x128xf32>, vector<1x8x128xf32> -> vector<6x8x128xf32>
    %16 = vector.shape_cast %15 : vector<6x8x128xf32> to vector<48x128xf32>
    %17 = arith.truncf %16 : vector<48x128xf32> to vector<48x128xbf16>
    %c0_9 = arith.constant 0 : index
    %c0_10 = arith.constant 0 : index
    %18 = vector.load %arg3[%c0_9, %c0_10] : memref<128x32xbf16, #tpu.memory_space<vmem>>, vector<128x32xbf16>
    %cst = arith.constant dense<0.000000e+00> : vector<48x32xf32>
    %19 = tpu.matmul %17, %18, %cst {dimension_numbers = #tpu.dot_dimension_numbers<[1], [0], [0], [1], [0, 0, 1, 1], [], []>} : vector<48x128xbf16>, vector<128x32xbf16>, vector<48x32xf32> -> vector<48x32xf32>
    %c0_11 = arith.constant 0 : index
    %c0_12 = arith.constant 0 : index
    %20 = vector.load %arg4[%c0_11, %c0_12] : memref<1x32xf32, #tpu.memory_space<vmem>>, vector<1x32xf32>
    %21 = vector.broadcast %20 : vector<1x32xf32> to vector<48x32xf32>
    %22 = arith.addf %19, %21 : vector<48x32xf32>
    %cst_13 = arith.constant 0.000000e+00 : f32
    %23 = vector.broadcast %cst_13 : f32 to vector<48x32xf32>
    %24 = arith.maximumf %22, %23 : vector<48x32xf32>
    %25 = vector.shape_cast %24 : vector<48x32xf32> to vector<6x8x32xf32>
    %26 = tpu.iota {dimensions = array<i32: 0>} : vector<6x8x32xi32>
    %c0_i32_14 = arith.constant 0 : i32
    %27 = vector.broadcast %c0_i32_14 : i32 to vector<6x8x32xi32>
    %28 = arith.cmpi eq, %26, %27 : vector<6x8x32xi32>
    %c0_i32_15 = arith.constant 0 : i32
    %29 = arith.cmpi eq, %arg1, %c0_i32_15 : i32
    %30 = vector.broadcast %29 : i1 to vector<6x8x32xi1>
    %31 = arith.andi %28, %30 : vector<6x8x32xi1>
    %c5_i32 = arith.constant 5 : i32
    %32 = vector.broadcast %c5_i32 : i32 to vector<6x8x32xi32>
    %33 = arith.cmpi eq, %26, %32 : vector<6x8x32xi32>
    %c1_i32_16 = arith.constant 1 : i32
    %34 = arith.cmpi eq, %arg1, %c1_i32_16 : i32
    %35 = vector.broadcast %34 : i1 to vector<6x8x32xi1>
    %36 = arith.andi %33, %35 : vector<6x8x32xi1>
    %37 = arith.ori %31, %36 : vector<6x8x32xi1>
    %cst_17 = arith.constant 0.000000e+00 : f32
    %38 = vector.broadcast %cst_17 : f32 to vector<6x8x32xf32>
    %39 = arith.select %37, %38, %25 : vector<6x8x32xi1>, vector<6x8x32xf32>
    %40 = tpu.iota {dimensions = array<i32: 1>} : vector<6x8x32xi32>
    %c0_i32_18 = arith.constant 0 : i32
    %41 = vector.broadcast %c0_i32_18 : i32 to vector<6x8x32xi32>
    %42 = arith.cmpi eq, %40, %41 : vector<6x8x32xi32>
    %c1_i32_19 = arith.constant 1 : i32
    %43 = tpu.dynamic_rotate %39 by %c1_i32_19 dim 1 : vector<6x8x32xf32>, i32 -> vector<6x8x32xf32>
    %cst_20 = arith.constant 0.000000e+00 : f32
    %44 = vector.broadcast %cst_20 : f32 to vector<6x8x32xf32>
    %45 = arith.select %42, %44, %43 : vector<6x8x32xi1>, vector<6x8x32xf32>
    %c7_i32_21 = arith.constant 7 : i32
    %46 = vector.broadcast %c7_i32_21 : i32 to vector<6x8x32xi32>
    %47 = arith.cmpi eq, %40, %46 : vector<6x8x32xi32>
    %c7_i32_22 = arith.constant 7 : i32
    %48 = tpu.dynamic_rotate %39 by %c7_i32_22 dim 1 : vector<6x8x32xf32>, i32 -> vector<6x8x32xf32>
    %cst_23 = arith.constant 0.000000e+00 : f32
    %49 = vector.broadcast %cst_23 : f32 to vector<6x8x32xf32>
    %50 = arith.select %47, %49, %48 : vector<6x8x32xi1>, vector<6x8x32xf32>
    %51 = arith.truncf %45 : vector<6x8x32xf32> to vector<6x8x32xbf16>
    %52 = arith.truncf %39 : vector<6x8x32xf32> to vector<6x8x32xbf16>
    %53 = arith.truncf %50 : vector<6x8x32xf32> to vector<6x8x32xbf16>
    %c0_24 = arith.constant 0 : index
    %c0_25 = arith.constant 0 : index
    %54 = vector.load %arg5[%c0_24, %c0_25] : memref<288x32xbf16, #tpu.memory_space<vmem>>, vector<288x32xbf16>
    %55 = vector.extract_strided_slice %51 {offsets = [0, 0, 0], sizes = [4, 8, 32], strides = [1, 1, 1]} : vector<6x8x32xbf16> to vector<4x8x32xbf16>
    %56 = vector.extract_strided_slice %52 {offsets = [0, 0, 0], sizes = [4, 8, 32], strides = [1, 1, 1]} : vector<6x8x32xbf16> to vector<4x8x32xbf16>
    %57 = vector.extract_strided_slice %53 {offsets = [0, 0, 0], sizes = [4, 8, 32], strides = [1, 1, 1]} : vector<6x8x32xbf16> to vector<4x8x32xbf16>
    %58 = tpu.concatenate %55, %56, %57 in 2 : vector<4x8x32xbf16>, vector<4x8x32xbf16>, vector<4x8x32xbf16> -> vector<4x8x96xbf16>
    %59 = vector.shape_cast %58 : vector<4x8x96xbf16> to vector<32x96xbf16>
    %60 = vector.extract_strided_slice %54 {offsets = [0, 0], sizes = [96, 32], strides = [1, 1]} : vector<288x32xbf16> to vector<96x32xbf16>
    %cst_26 = arith.constant dense<0.000000e+00> : vector<32x32xf32>
    %61 = tpu.matmul %59, %60, %cst_26 {dimension_numbers = #tpu.dot_dimension_numbers<[1], [0], [0], [1], [0, 0, 1, 1], [], []>} : vector<32x96xbf16>, vector<96x32xbf16>, vector<32x32xf32> -> vector<32x32xf32>
    %62 = vector.extract_strided_slice %51 {offsets = [1, 0, 0], sizes = [4, 8, 32], strides = [1, 1, 1]} : vector<6x8x32xbf16> to vector<4x8x32xbf16>
    %63 = vector.extract_strided_slice %52 {offsets = [1, 0, 0], sizes = [4, 8, 32], strides = [1, 1, 1]} : vector<6x8x32xbf16> to vector<4x8x32xbf16>
    %64 = vector.extract_strided_slice %53 {offsets = [1, 0, 0], sizes = [4, 8, 32], strides = [1, 1, 1]} : vector<6x8x32xbf16> to vector<4x8x32xbf16>
    %65 = tpu.concatenate %62, %63, %64 in 2 : vector<4x8x32xbf16>, vector<4x8x32xbf16>, vector<4x8x32xbf16> -> vector<4x8x96xbf16>
    %66 = vector.shape_cast %65 : vector<4x8x96xbf16> to vector<32x96xbf16>
    %67 = vector.extract_strided_slice %54 {offsets = [96, 0], sizes = [96, 32], strides = [1, 1]} : vector<288x32xbf16> to vector<96x32xbf16>
    %cst_27 = arith.constant dense<0.000000e+00> : vector<32x32xf32>
    %68 = tpu.matmul %66, %67, %cst_27 {dimension_numbers = #tpu.dot_dimension_numbers<[1], [0], [0], [1], [0, 0, 1, 1], [], []>} : vector<32x96xbf16>, vector<96x32xbf16>, vector<32x32xf32> -> vector<32x32xf32>
    %69 = arith.addf %61, %68 : vector<32x32xf32>
    %70 = vector.extract_strided_slice %51 {offsets = [2, 0, 0], sizes = [4, 8, 32], strides = [1, 1, 1]} : vector<6x8x32xbf16> to vector<4x8x32xbf16>
    %71 = vector.extract_strided_slice %52 {offsets = [2, 0, 0], sizes = [4, 8, 32], strides = [1, 1, 1]} : vector<6x8x32xbf16> to vector<4x8x32xbf16>
    %72 = vector.extract_strided_slice %53 {offsets = [2, 0, 0], sizes = [4, 8, 32], strides = [1, 1, 1]} : vector<6x8x32xbf16> to vector<4x8x32xbf16>
    %73 = tpu.concatenate %70, %71, %72 in 2 : vector<4x8x32xbf16>, vector<4x8x32xbf16>, vector<4x8x32xbf16> -> vector<4x8x96xbf16>
    %74 = vector.shape_cast %73 : vector<4x8x96xbf16> to vector<32x96xbf16>
    %75 = vector.extract_strided_slice %54 {offsets = [192, 0], sizes = [96, 32], strides = [1, 1]} : vector<288x32xbf16> to vector<96x32xbf16>
    %cst_28 = arith.constant dense<0.000000e+00> : vector<32x32xf32>
    %76 = tpu.matmul %74, %75, %cst_28 {dimension_numbers = #tpu.dot_dimension_numbers<[1], [0], [0], [1], [0, 0, 1, 1], [], []>} : vector<32x96xbf16>, vector<96x32xbf16>, vector<32x32xf32> -> vector<32x32xf32>
    %77 = arith.addf %69, %76 : vector<32x32xf32>
    %c0_29 = arith.constant 0 : index
    %c0_30 = arith.constant 0 : index
    %78 = vector.load %arg6[%c0_29, %c0_30] : memref<1x32xf32, #tpu.memory_space<vmem>>, vector<1x32xf32>
    %79 = vector.broadcast %78 : vector<1x32xf32> to vector<32x32xf32>
    %80 = arith.addf %77, %79 : vector<32x32xf32>
    %cst_31 = arith.constant 0.000000e+00 : f32
    %81 = vector.broadcast %cst_31 : f32 to vector<32x32xf32>
    %82 = arith.maximumf %80, %81 : vector<32x32xf32>
    %83 = arith.truncf %82 : vector<32x32xf32> to vector<32x32xbf16>
    %c0_32 = arith.constant 0 : index
    %c0_33 = arith.constant 0 : index
    %84 = vector.load %arg7[%c0_32, %c0_33] : memref<32x128xbf16, #tpu.memory_space<vmem>>, vector<32x128xbf16>
    %cst_34 = arith.constant dense<0.000000e+00> : vector<32x128xf32>
    %85 = tpu.matmul %83, %84, %cst_34 {dimension_numbers = #tpu.dot_dimension_numbers<[1], [0], [0], [1], [0, 0, 1, 1], [], []>} : vector<32x32xbf16>, vector<32x128xbf16>, vector<32x128xf32> -> vector<32x128xf32>
    %c0_35 = arith.constant 0 : index
    %c0_36 = arith.constant 0 : index
    %86 = vector.load %arg8[%c0_35, %c0_36] : memref<1x128xf32, #tpu.memory_space<vmem>>, vector<1x128xf32>
    %87 = vector.broadcast %86 : vector<1x128xf32> to vector<32x128xf32>
    %88 = arith.addf %85, %87 : vector<32x128xf32>
    %89 = vector.shape_cast %11 : vector<4x8x128xf32> to vector<32x128xf32>
    %90 = arith.addf %88, %89 : vector<32x128xf32>
    %cst_37 = arith.constant 0.000000e+00 : f32
    %91 = vector.broadcast %cst_37 : f32 to vector<32x128xf32>
    %92 = arith.maximumf %90, %91 : vector<32x128xf32>
    %93 = vector.shape_cast %92 : vector<32x128xf32> to vector<4x8x128xf32>
    %94 = arith.truncf %93 : vector<4x8x128xf32> to vector<4x8x128xbf16>
    %c0_38 = arith.constant 0 : index
    %c0_39 = arith.constant 0 : index
    %c0_40 = arith.constant 0 : index
    %c0_41 = arith.constant 0 : index
    %95 = vector.load %arg9[%c0_38, %c0_39, %c0_40, %c0_41] : memref<1x4x8x128xbf16, #tpu.memory_space<vmem>>, vector<1x4x8x128xbf16>
    %96 = vector.shape_cast %95 : vector<1x4x8x128xbf16> to vector<4x8x128xbf16>
    %97 = vector.shape_cast %94 : vector<4x8x128xbf16> to vector<1x4x8x128xbf16>
    tpu.vector_store %arg9[%c0_38, %c0_39, %c0_40, %c0_41], %97 {strides = array<i32>} : memref<1x4x8x128xbf16, #tpu.memory_space<vmem>>, vector<1x4x8x128xbf16>,
    return
  }
  func.func @transform_0(%arg0: i32, %arg1: i32) -> (i32, i32, i32, i32) {
    %c0_i32 = arith.constant 0 : i32
    %c0_i32_0 = arith.constant 0 : i32
    %c0_i32_1 = arith.constant 0 : i32
    %c0_i32_2 = arith.constant 0 : i32
    return %arg0, %c0_i32, %c0_i32_0, %c0_i32_1 : i32, i32, i32, i32
  }
  func.func @transform_1(%arg0: i32, %arg1: i32) -> (i32, i32) {
    %c0_i32 = arith.constant 0 : i32
    %c0_i32_0 = arith.constant 0 : i32
    %c0_i32_1 = arith.constant 0 : i32
    return %c0_i32, %c0_i32_0 : i32, i32
  }
  func.func @transform_2(%arg0: i32, %arg1: i32) -> (i32, i32) {
    %c0_i32 = arith.constant 0 : i32
    %c0_i32_0 = arith.constant 0 : i32
    %c0_i32_1 = arith.constant 0 : i32
    return %c0_i32, %c0_i32_0 : i32, i32
  }
  func.func @transform_3(%arg0: i32, %arg1: i32) -> (i32, i32) {
    %c0_i32 = arith.constant 0 : i32
    %c0_i32_0 = arith.constant 0 : i32
    %c0_i32_1 = arith.constant 0 : i32
    return %c0_i32, %c0_i32_0 : i32, i32
  }
  func.func @transform_4(%arg0: i32, %arg1: i32) -> (i32, i32) {
    %c0_i32 = arith.constant 0 : i32
    %c0_i32_0 = arith.constant 0 : i32
    %c0_i32_1 = arith.constant 0 : i32
    return %c0_i32, %c0_i32_0 : i32, i32
  }
  func.func @transform_5(%arg0: i32, %arg1: i32) -> (i32, i32) {
    %c0_i32 = arith.constant 0 : i32
    %c0_i32_0 = arith.constant 0 : i32
    %c0_i32_1 = arith.constant 0 : i32
    return %c0_i32, %c0_i32_0 : i32, i32
  }
  func.func @transform_6(%arg0: i32, %arg1: i32) -> (i32, i32) {
    %c0_i32 = arith.constant 0 : i32
    %c0_i32_0 = arith.constant 0 : i32
    %c0_i32_1 = arith.constant 0 : i32
    return %c0_i32, %c0_i32_0 : i32, i32
  }
  func.func @transform_7(%arg0: i32, %arg1: i32) -> (i32, i32, i32, i32) {
    %c0_i32 = arith.constant 0 : i32
    %c0_i32_0 = arith.constant 0 : i32
    %c0_i32_1 = arith.constant 0 : i32
    return %arg0, %arg1, %c0_i32, %c0_i32_0 : i32, i32, i32, i32
  }
}

</mosaic_0001>

<llo_original>
// kernel: _bottleneck_forward_nchw.1
$region0: #{_bottleneck_forward_nchw.1}
  #allocation0 [shape = 'u32[]', space=smem, size = 0x4, offset = 0x4, fixed_abs, tag = 'smem constant byte address 0x4 - core index']
  #allocation1 [shape = 'u32[72,128]{1,0:T(1,128)}', space=vmem, size = 0x9000, scoped, tag = 'internal scratch']
  %s0 = inlined_call_operand.vmem [shape: f32[2,8,8,128], index: 0, kind: input, shape index: {}]
  %s1 = inlined_call_operand.vmem [shape: bf16[128,32], index: 1, kind: input, shape index: {}]
  %s2 = inlined_call_operand.vmem [shape: f32[1,32], index: 2, kind: input, shape index: {}]
  %s3 = inlined_call_operand.vmem [shape: bf16[288,32], index: 3, kind: input, shape index: {}]
  %s4 = inlined_call_operand.vmem [shape: f32[1,32], index: 4, kind: input, shape index: {}]
  %s5 = inlined_call_operand.vmem [shape: bf16[32,128], index: 5, kind: input, shape index: {}]
  %s6 = inlined_call_operand.vmem [shape: f32[1,128], index: 6, kind: input, shape index: {}]
  %s7 = inlined_call_operand.hbm [shape: bf16[2,8,8,128], index: 7, kind: output, shape index: {}]
  %s8 = sld [smem:[#allocation0]]
  $region61: #{_bottleneck_forward_nchw.1} parent=0
    _
  %s10 = ssub.s32 1, %s8
  %s11 = scalar_select 0, %s10, %s8
  $region1: #{_bottleneck_forward_nchw.1} parent=0
    #allocation2 [shape = 'u8[16384]{0}', space=vmem, size = 0x4000, scoped, tag = 'output window, operand 0']
    #allocation3 [shape = 's32[2]{0}', space=sflag, size = 0x8, scoped, tag = 'scoped memory for _bottleneck_forward_nchw.1']
    %12 = vsyncpa [#allocation3], 0
    %s13 = scalar_lea.sflag [#allocation3], 1
    %14 = vsyncpa %s13, 0
    loop: start=0, step=1, limit=6
    $region2: #{_bottleneck_forward_nchw.1} parent=1 // loop_pre_header
      _
    $region3: #{_bottleneck_forward_nchw.1} parent=1 // loop_header
      %s16 = sphi 0, %s20
      %p17 = scmp.ge.s32.totalorder %s16, 6
      %s23 = sphi 0, %s35
      %s24 = sphi 0, %s31
      %s25 = sphi 0, %s23
      %s26 = sphi 0, %s24
      %s27 = sphi 0, %s25
      %s28 = sphi 0, %s26
      %s38 = sphi 0, %s40
      %s41 = sphi 0, %s38
      %s42 = sphi 0, %s41
      %s58 = sphi 0, %s42
      %s62 = sphi 0, %s62
      %s64 = sphi 0, %s62
      %s65 = sphi 0, %s64
      %s79 = sphi 0, %s65
      %s83 = sphi 0, %s83
      %s85 = sphi 0, %s83
      %s86 = sphi 0, %s85
      %s100 = sphi 0, %s86
      %s104 = sphi 0, %s104
      %s106 = sphi 0, %s104
      %s107 = sphi 0, %s106
      %s121 = sphi 0, %s107
      %s125 = sphi 0, %s125
      %s127 = sphi 0, %s125
      %s128 = sphi 0, %s127
      %s142 = sphi 0, %s128
      %s146 = sphi 0, %s146
      %s148 = sphi 0, %s146
      %s149 = sphi 0, %s148
      %s163 = sphi 0, %s149
      %s167 = sphi 0, %s167
      %s169 = sphi 0, %s167
      %s170 = sphi 0, %s169
      %s184 = sphi 0, %s170
      %s192 = sphi 0, %s194
      %s195 = sphi 0, %s192
      %s196 = sphi 0, %s195
      %s212 = sphi 0, %s196
    $region4: #{_bottleneck_forward_nchw.1} parent=1 // loop_header_branch
      %19 = sbr.rel (%p17) target = $region8
    $region5: #{_bottleneck_forward_nchw.1} parent=1 // loop_body
      %s21 = ssub.s32 %s16, 1
      %s22 = ssub.s32 %s16, 2
      %s29 = sadd.s32 1, %s24
      %p30 = scmp.ge.s32.totalorder %s29, 2
      %s31 = scalar_select %p30, 0, %s29
      %s32 = sadd.s32 1, %s23
      %s33 = scalar_select %p30, %s32, %s23
      %p34 = scmp.ge.s32.totalorder %s33, 2
      %s35 = scalar_select %p34, 0, %s33
      %s36 = ssub.s32 %s23, %s35
      %p37 = scmp.eq.s32.totalorder %s36, 0
      %s39 = sadd.s32 %s38, 1
      %s40 = scalar_select %p37, %s38, %s39
      %p43 = pneg %p37
      %p44 = scmp.eq.s32.totalorder %s16, 3
      %p45 = por %p43, %p44
      %p46 = scmp.ne.s32.totalorder %s38, %s41
      %p47 = scmp.eq.s32.totalorder %s16, 0
      %p48 = por %p46, %p47
      %p49 = scmp.ne.s32.totalorder %s38, %s41
      %p50 = scmp.eq.s32.totalorder %s21, 3
      %p51 = por %p49, %p50
      %p52 = scmp.ne.s32.totalorder %s41, %s42
      %p53 = scmp.eq.s32.totalorder %s21, 0
      %p54 = por %p52, %p53
      %p55 = scmp.ne.s32.totalorder %s41, %s42
      %p56 = scmp.eq.s32.totalorder %s22, 3
      %p57 = por %p55, %p56
      %p59 = scmp.ne.s32.totalorder %s42, %s58
      %p60 = scmp.eq.s32.totalorder %s22, 0
      %p61 = por %p59, %p60
      %s63 = sadd.s32 %s62, 1
      %p66 = scmp.eq.s32.totalorder %s16, 3
      %p67 = scmp.ne.s32.totalorder %s62, %s64
      %p68 = scmp.eq.s32.totalorder %s16, 0
      %p69 = por %p67, %p68
      %p70 = scmp.ne.s32.totalorder %s62, %s64
      %p71 = scmp.eq.s32.totalorder %s21, 3
      %p72 = por %p70, %p71
      %p73 = scmp.ne.s32.totalorder %s64, %s65
      %p74 = scmp.eq.s32.totalorder %s21, 0
      %p75 = por %p73, %p74
      %p76 = scmp.ne.s32.totalorder %s64, %s65
      %p77 = scmp.eq.s32.totalorder %s22, 3
      %p78 = por %p76, %p77
      %p80 = scmp.ne.s32.totalorder %s65, %s79
      %p81 = scmp.eq.s32.totalorder %s22, 0
      %p82 = por %p80, %p81
      %s84 = sadd.s32 %s83, 1
      %p87 = scmp.eq.s32.totalorder %s16, 3
      %p88 = scmp.ne.s32.totalorder %s83, %s85
      %p89 = scmp.eq.s32.totalorder %s16, 0
      %p90 = por %p88, %p89
      %p91 = scmp.ne.s32.totalorder %s83, %s85
      %p92 = scmp.eq.s32.totalorder %s21, 3
      %p93 = por %p91, %p92
      %p94 = scmp.ne.s32.totalorder %s85, %s86
      %p95 = scmp.eq.s32.totalorder %s21, 0
      %p96 = por %p94, %p95
      %p97 = scmp.ne.s32.totalorder %s85, %s86
      %p98 = scmp.eq.s32.totalorder %s22, 3
      %p99 = por %p97, %p98
      %p101 = scmp.ne.s32.totalorder %s86, %s100
      %p102 = scmp.eq.s32.totalorder %s22, 0
      %p103 = por %p101, %p102
      %s105 = sadd.s32 %s104, 1
      %p108 = scmp.eq.s32.totalorder %s16, 3
      %p109 = scmp.ne.s32.totalorder %s104, %s106
      %p110 = scmp.eq.s32.totalorder %s16, 0
      %p111 = por %p109, %p110
      %p112 = scmp.ne.s32.totalorder %s104, %s106
      %p113 = scmp.eq.s32.totalorder %s21, 3
      %p114 = por %p112, %p113
      %p115 = scmp.ne.s32.totalorder %s106, %s107
      %p116 = scmp.eq.s32.totalorder %s21, 0
      %p117 = por %p115, %p116
      %p118 = scmp.ne.s32.totalorder %s106, %s107
      %p119 = scmp.eq.s32.totalorder %s22, 3
      %p120 = por %p118, %p119
      %p122 = scmp.ne.s32.totalorder %s107, %s121
      %p123 = scmp.eq.s32.totalorder %s22, 0
      %p124 = por %p122, %p123
      %s126 = sadd.s32 %s125, 1
      %p129 = scmp.eq.s32.totalorder %s16, 3
      %p130 = scmp.ne.s32.totalorder %s125, %s127
      %p131 = scmp.eq.s32.totalorder %s16, 0
      %p132 = por %p130, %p131
      %p133 = scmp.ne.s32.totalorder %s125, %s127
      %p134 = scmp.eq.s32.totalorder %s21, 3
      %p135 = por %p133, %p134
      %p136 = scmp.ne.s32.totalorder %s127, %s128
      %p137 = scmp.eq.s32.totalorder %s21, 0
      %p138 = por %p136, %p137
      %p139 = scmp.ne.s32.totalorder %s127, %s128
      %p140 = scmp.eq.s32.totalorder %s22, 3
      %p141 = por %p139, %p140
      %p143 = scmp.ne.s32.totalorder %s128, %s142
      %p144 = scmp.eq.s32.totalorder %s22, 0
      %p145 = por %p143, %p144
      %s147 = sadd.s32 %s146, 1
      %p150 = scmp.eq.s32.totalorder %s16, 3
      %p151 = scmp.ne.s32.totalorder %s146, %s148
      %p152 = scmp.eq.s32.totalorder %s16, 0
      %p153 = por %p151, %p152
      %p154 = scmp.ne.s32.totalorder %s146, %s148
      %p155 = scmp.eq.s32.totalorder %s21, 3
      %p156 = por %p154, %p155
      %p157 = scmp.ne.s32.totalorder %s148, %s149
      %p158 = scmp.eq.s32.totalorder %s21, 0
      %p159 = por %p157, %p158
      %p160 = scmp.ne.s32.totalorder %s148, %s149
      %p161 = scmp.eq.s32.totalorder %s22, 3
      %p162 = por %p160, %p161
      %p164 = scmp.ne.s32.totalorder %s149, %s163
      %p165 = scmp.eq.s32.totalorder %s22, 0
      %p166 = por %p164, %p165
      %s168 = sadd.s32 %s167, 1
      %p171 = scmp.eq.s32.totalorder %s16, 3
      %p172 = scmp.ne.s32.totalorder %s167, %s169
      %p173 = scmp.eq.s32.totalorder %s16, 0
      %p174 = por %p172, %p173
      %p175 = scmp.ne.s32.totalorder %s167, %s169
      %p176 = scmp.eq.s32.totalorder %s21, 3
      %p177 = por %p175, %p176
      %p178 = scmp.ne.s32.totalorder %s169, %s170
      %p179 = scmp.eq.s32.totalorder %s21, 0
      %p180 = por %p178, %p179
      %p181 = scmp.ne.s32.totalorder %s169, %s170
      %p182 = scmp.eq.s32.totalorder %s22, 3
      %p183 = por %p181, %p182
      %p185 = scmp.ne.s32.totalorder %s170, %s184
      %p186 = scmp.eq.s32.totalorder %s22, 0
      %p187 = por %p185, %p186
      %s188 = ssub.s32 %s23, %s35
      %s189 = ssub.s32 %s24, %s31
      %s190 = sor.u32 %s188, %s189
      %p191 = scmp.eq.s32.totalorder %s190, 0
      %s193 = sadd.s32 %s192, 1
      %s194 = scalar_select %p191, %s192, %s193
      %p197 = pneg %p191
      %p198 = scmp.eq.s32.totalorder %s16, 3
      %p199 = por %p197, %p198
      %p200 = scmp.ne.s32.totalorder %s192, %s195
      %p201 = scmp.eq.s32.totalorder %s16, 0
      %p202 = por %p200, %p201
      %p203 = scmp.ne.s32.totalorder %s192, %s195
      %p204 = scmp.eq.s32.totalorder %s21, 3
      %p205 = por %p203, %p204
      %p206 = scmp.ne.s32.totalorder %s195, %s196
      %p207 = scmp.eq.s32.totalorder %s21, 0
      %p208 = por %p206, %p207
      %p209 = scmp.ne.s32.totalorder %s195, %s196
      %p210 = scmp.eq.s32.totalorder %s22, 3
      %p211 = por %p209, %p210
      %p213 = scmp.ne.s32.totalorder %s196, %s212
      %p214 = scmp.eq.s32.totalorder %s22, 0
      %p215 = por %p213, %p214
      %p216 = scmp.le.s32.totalorder 1, %s16
      %p217 = scmp.lt.s32.totalorder %s16, 5
      %p218 = pnand %p216, %p217
      %p219 = pneg %p218
      // Predicated region
      $region9: #{_bottleneck_forward_nchw.1} parent=5 // pred_check
        _
      $region10: #{_bottleneck_forward_nchw.1} parent=5 // pred_check_branch
        %221 = sbr.rel (%p218) target = $region12
      $region11: #{_bottleneck_forward_nchw.1} parent=5 // pred_region
        %s222 = ssub.s32 %s16, 1
        // Predicated region
        $region13: #{_bottleneck_forward_nchw.1} parent=11 // pred_check
          %p223 = pneg %p75
        $region14: #{_bottleneck_forward_nchw.1} parent=11 // pred_check_branch
          %225 = sbr.rel (%p223) target = $region16
        $region15: #{_bottleneck_forward_nchw.1} parent=11 // pred_region
          _
        $region16: #{_bottleneck_forward_nchw.1} parent=11 // pred_fallthru
          _
        // Predicated region
        $region17: #{_bottleneck_forward_nchw.1} parent=11 // pred_check
          %p226 = pneg %p96
        $region18: #{_bottleneck_forward_nchw.1} parent=11 // pred_check_branch
          %228 = sbr.rel (%p226) target = $region20
        $region19: #{_bottleneck_forward_nchw.1} parent=11 // pred_region
          _
        $region20: #{_bottleneck_forward_nchw.1} parent=11 // pred_fallthru
          _
        // Predicated region
        $region21: #{_bottleneck_forward_nchw.1} parent=11 // pred_check
          %p229 = pneg %p117
        $region22: #{_bottleneck_forward_nchw.1} parent=11 // pred_check_branch
          %231 = sbr.rel (%p229) target = $region24
        $region23: #{_bottleneck_forward_nchw.1} parent=11 // pred_region
          _
        $region24: #{_bottleneck_forward_nchw.1} parent=11 // pred_fallthru
          _
        // Predicated region
        $region25: #{_bottleneck_forward_nchw.1} parent=11 // pred_check
          %p232 = pneg %p138
        $region26: #{_bottleneck_forward_nchw.1} parent=11 // pred_check_branch
          %234 = sbr.rel (%p232) target = $region28
        $region27: #{_bottleneck_forward_nchw.1} parent=11 // pred_region
          _
        $region28: #{_bottleneck_forward_nchw.1} parent=11 // pred_fallthru
          _
        // Predicated region
        $region29: #{_bottleneck_forward_nchw.1} parent=11 // pred_check
          %p235 = pneg %p159
        $region30: #{_bottleneck_forward_nchw.1} parent=11 // pred_check_branch
          %237 = sbr.rel (%p235) target = $region32
        $region31: #{_bottleneck_forward_nchw.1} parent=11 // pred_region
          _
        $region32: #{_bottleneck_forward_nchw.1} parent=11 // pred_fallthru
          _
        // Predicated region
        $region33: #{_bottleneck_forward_nchw.1} parent=11 // pred_check
          %p238 = pneg %p180
        $region34: #{_bottleneck_forward_nchw.1} parent=11 // pred_check_branch
          %240 = sbr.rel (%p238) target = $region36
        $region35: #{_bottleneck_forward_nchw.1} parent=11 // pred_region
          _
        $region36: #{_bottleneck_forward_nchw.1} parent=11 // pred_fallthru
          _
      $region12: #{_bottleneck_forward_nchw.1} parent=5 // pred_fallthru
        _
      %p241 = scmp.lt.s32.totalorder %s16, 4
      // Predicated region
      $region37: #{_bottleneck_forward_nchw.1} parent=5 // pred_check
        %p242 = pneg %p241
      $region38: #{_bottleneck_forward_nchw.1} parent=5 // pred_check_branch
        %244 = sbr.rel (%p242) target = $region40
      $region39: #{_bottleneck_forward_nchw.1} parent=5 // pred_region
        // Predicated region
        $region41: #{_bottleneck_forward_nchw.1} parent=39 // pred_check
          %p245 = pneg %p48
        $region42: #{_bottleneck_forward_nchw.1} parent=39 // pred_check_branch
          %247 = sbr.rel (%p245) target = $region44
        $region43: #{_bottleneck_forward_nchw.1} parent=39 // pred_region
          %p248 = scmp.lt.s32.totalorder %s23, 1
          %s249 = scalar_select %p248, %s23, 1
          %s250 = smul.addr %s249, 8
          %s251 = smul.addr %s250, 8
          %s252 = scalar_lea.vmem %s0, %s251
        $region44: #{_bottleneck_forward_nchw.1} parent=39 // pred_fallthru
          _
      $region40: #{_bottleneck_forward_nchw.1} parent=5 // pred_fallthru
        _
      %p253 = scmp.le.s32.totalorder 1, %s16
      %p254 = scmp.lt.s32.totalorder %s16, 5
      %p255 = pnand %p253, %p254
      %p256 = pneg %p255
      // Predicated region
      $region45: #{_bottleneck_forward_nchw.1} parent=5 // pred_check
        _
      $region46: #{_bottleneck_forward_nchw.1} parent=5 // pred_check_branch
        %258 = sbr.rel (%p255) target = $region48
      $region47: #{_bottleneck_forward_nchw.1} parent=5 // pred_region
        %s259 = ssub.s32 %s16, 1
        %p260 = scmp.lt.s32.totalorder %s25, 1
        %s261 = scalar_select %p260, %s25, 1
        %s262 = smul.addr %s261, 8
        %s263 = smul.addr %s262, 8
        %s264 = scalar_lea.vmem %s0, %s263
        %p265 = pneg %p54
        %p266 = pneg %p51
        %p267 = pneg %p75
        %p268 = pneg %p72
        %p269 = pneg %p96
        %p270 = pneg %p93
        %p271 = pneg %p117
        %p272 = pneg %p114
        %p273 = pneg %p138
        %p274 = pneg %p135
        %p275 = pneg %p159
        %p276 = pneg %p156
        %p277 = pneg %p180
        %p278 = pneg %p177
        %p279 = pneg %p208
        %p280 = pneg %p205
        %s281 = sand.u32 %s195, 1
        %s282 = scalar_lea.sflag [#allocation3], %s281
        %s283 = sand.u32 %s195, 1
        %s284 = smul.addr %s283, 16
        %s285 = scalar_lea.vmem [#allocation2], %s284
        %p286 = scmp.lt.s32.totalorder %s25, 1
        %s287 = scalar_select %p286, %s25, 1
        %s288 = smul.addr %s287, 8
        %s289 = smul.addr %s288, 8
        %s290 = scalar_lea.vmem %s0, %s289
        %s291 = smul.u32 4, %s26
        %s293 = smul.u32 %s26, 4
        %s294 = ssub.s32 %s293, 1
        %p295 = scmp.gt.s32.totalorder %s294, 0
        %s296 = scalar_select %p295, %s294, 0
        %s297 = sadd.s32 %s293, 4
        %p298 = scmp.lt.s32.totalorder %s297, 7
        %s299 = scalar_select %p298, %s297, 7
        %s300 = smul.u32 %s296, 8
        %s301 = scalar_lea.vmem %s290, %s300
        %v302 = vld [vmem:[%s301] sm:$0xff]
        %s303 = smul.u32 %s293, 8
        %s304 = scalar_lea.vmem %s290, %s303
        %v305 = vld [vmem:[%s304] sm:$0xff]
        %v306 = vld [vmem:[%s304 + $0x8] sm:$0xff]
        %v307 = vld [vmem:[%s304 + $0x10] sm:$0xff]
        %v308 = vld [vmem:[%s304 + $0x18] sm:$0xff]
        %s309 = smul.u32 %s299, 8
        %s310 = scalar_lea.vmem %s290, %s309
        %v311 = vld [vmem:[%s310] sm:$0xff]
        %v312 = vpack.c.bf16 %v305, %v302
        %v313 = vpack.c.bf16 %v307, %v306
        %v314 = vpack.c.bf16 %v311, %v308
        %v315 = vld [vmem:[%s1] sm:$0xf]
        %v316 = vld [vmem:[%s1 + $0x4] sm:$0xf]
        %v317 = vld [vmem:[%s1 + $0x8] sm:$0xf]
        %v318 = vld [vmem:[%s1 + $0xc] sm:$0xf]
        %v319 = vld [vmem:[%s1 + $0x10] sm:$0xf]
        %v320 = vld [vmem:[%s1 + $0x14] sm:$0xf]
        %v321 = vld [vmem:[%s1 + $0x18] sm:$0xf]
        %v322 = vld [vmem:[%s1 + $0x1c] sm:$0xf]
        %v323 = vld [vmem:[%s1 + $0x20] sm:$0xf]
        %v324 = vld [vmem:[%s1 + $0x24] sm:$0xf]
        %v325 = vld [vmem:[%s1 + $0x28] sm:$0xf]
        %v326 = vld [vmem:[%s1 + $0x2c] sm:$0xf]
        %v327 = vld [vmem:[%s1 + $0x30] sm:$0xf]
        %v328 = vld [vmem:[%s1 + $0x34] sm:$0xf]
        %v329 = vld [vmem:[%s1 + $0x38] sm:$0xf]
        %v330 = vld [vmem:[%s1 + $0x3c] sm:$0xf]
        %v331 = vld [vmem:[%s2] sm:$0x1]
        %v333 = vperm.slane %v331, 0
        %v351 = vunpack.c.l.b16 %v315
        %v352 = vunpack.c.l.b16 %v316
        %v353 = vunpack.c.l.b16 %v317
        %v354 = vunpack.c.l.b16 %v318
        %v355 = vunpack.c.l.b16 %v319
        %v356 = vunpack.c.l.b16 %v320
        %v357 = vunpack.c.l.b16 %v321
        %v358 = vunpack.c.l.b16 %v322
        %v359 = vunpack.c.l.b16 %v323
        %v360 = vunpack.c.l.b16 %v324
        %v361 = vunpack.c.l.b16 %v325
        %v362 = vunpack.c.l.b16 %v326
        %v363 = vunpack.c.l.b16 %v327
        %v364 = vunpack.c.l.b16 %v328
        %v365 = vunpack.c.l.b16 %v329
        %v366 = vunpack.c.l.b16 %v330
        %v367 = vpack.c.b16 %v352, %v351
        %v368 = vpack.c.b16 %v354, %v353
        %v369 = vpack.c.b16 %v356, %v355
        %v370 = vpack.c.b16 %v358, %v357
        %v371 = vpack.c.b16 %v360, %v359
        %v372 = vpack.c.b16 %v362, %v361
        %v373 = vpack.c.b16 %v364, %v363
        %v374 = vpack.c.b16 %v366, %v365
        %383 = vmatpush.bf16.msra.mxu0 %v374
        %384 = vmatpush.bf16.msra.mxu0 %v373
        %385 = vmatpush.bf16.msra.mxu0 %v372
        %386 = vmatpush.bf16.msra.mxu0 %v371
        %387 = vmatpush.bf16.msra.mxu0 %v370
        %388 = vmatpush.bf16.msra.mxu0 %v369
        %389 = vmatpush.bf16.msra.mxu0 %v368
        %390 = vmatpush.bf16.msra.mxu0 %v367
        %391 = vmatmul.bf16.gmra.mxu0 %v312
        %v392 = vpop.f32.mrf.mxu0
        %v393 = vadd.f32 %v333, %v392
        %v394 = vpop.f32.mrf.mxu0
        %v395 = vadd.f32 %v333, %v394
        %396 = vmatmul.bf16.gmra.mxu0 %v313
        %v397 = vpop.f32.mrf.mxu0
        %v398 = vadd.f32 %v333, %v397
        %v399 = vpop.f32.mrf.mxu0
        %v400 = vadd.f32 %v333, %v399
        %401 = vmatmul.bf16.gmra.mxu0 %v314
        %v402 = vpop.f32.mrf.mxu0
        %v403 = vadd.f32 %v333, %v402
        %v404 = vpop.f32.mrf.mxu0
        %v405 = vadd.f32 %v333, %v404
        %406 = vdwg.mxu0
        %v407 = vmax.f32 %v393, 0.0
        %v408 = vmax.f32 %v395, 0.0
        %v409 = vmax.f32 %v398, 0.0
        %v410 = vmax.f32 %v400, 0.0
        %v411 = vmax.f32 %v403, 0.0
        %v412 = vmax.f32 %v405, 0.0
        %p413 = scmp.eq.s32.totalorder %s26, 0
        %s414 = scalar_select %p413, 1, 0
        %v415 = vstv %s414
        %vm416 = vcmp.eq.s32.totalorder %v415, 1
        %p417 = scmp.eq.s32.totalorder %s26, 1
        %s418 = scalar_select %p417, 1, 0
        %v419 = vstv %s418
        %vm420 = vcmp.eq.s32.totalorder %v419, 1
        %v421 = vsel %vm416, 0.0, %v407
        %v422 = vsel 0, 0.0, %v408
        %v423 = vsel 0, 0.0, %v409
        %v424 = vsel 0, 0.0, %v410
        %v425 = vsel 0, 0.0, %v411
        %v426 = vsel %vm420, 0.0, %v412
        %v427 = vlaneseq
        %v428 = vshrl.u32 %v427, 7
        %vm429 = vcmp.eq.s32.totalorder %v428, 0
        %v430 = vrot.slane %v421, 7
        %v431 = vrot.slane %v422, 7
        %v432 = vrot.slane %v423, 7
        %v433 = vrot.slane %v424, 7
        %v434 = vrot.slane %v425, 7
        %v435 = vrot.slane %v426, 7
        %v436 = vsel %vm429, 0.0, %v430
        %v437 = vsel %vm429, 0.0, %v431
        %v438 = vsel %vm429, 0.0, %v432
        %v439 = vsel %vm429, 0.0, %v433
        %v440 = vsel %vm429, 0.0, %v434
        %v441 = vsel %vm429, 0.0, %v435
        %vm442 = vcmp.eq.s32.totalorder %v428, 7
        %v443 = vrot.slane %v421, 1
        %v444 = vrot.slane %v422, 1
        %v445 = vrot.slane %v423, 1
        %v446 = vrot.slane %v424, 1
        %v447 = vrot.slane %v425, 1
        %v448 = vrot.slane %v426, 1
        %v449 = vsel %vm442, 0.0, %v443
        %v450 = vsel %vm442, 0.0, %v444
        %v451 = vsel %vm442, 0.0, %v445
        %v452 = vsel %vm442, 0.0, %v446
        %v453 = vsel %vm442, 0.0, %v447
        %v454 = vsel %vm442, 0.0, %v448
        %v455 = vpack.c.bf16 %v436, %v436
        %v456 = vpack.c.bf16 %v437, %v437
        %v457 = vpack.c.bf16 %v438, %v438
        %v458 = vpack.c.bf16 %v439, %v439
        %v459 = vpack.c.bf16 %v440, %v440
        %v460 = vpack.c.bf16 %v441, %v441
        %v461 = vpack.c.bf16 %v421, %v421
        %v462 = vpack.c.bf16 %v422, %v422
        %v463 = vpack.c.bf16 %v423, %v423
        %v464 = vpack.c.bf16 %v424, %v424
        %v465 = vpack.c.bf16 %v425, %v425
        %v466 = vpack.c.bf16 %v426, %v426
        %v467 = vpack.c.bf16 %v449, %v449
        %v468 = vpack.c.bf16 %v450, %v450
        %v469 = vpack.c.bf16 %v451, %v451
        %v470 = vpack.c.bf16 %v452, %v452
        %v471 = vpack.c.bf16 %v453, %v453
        %v472 = vpack.c.bf16 %v454, %v454
        %v473 = vld [vmem:[%s3] sm:$0xf]
        %v474 = vld [vmem:[%s3 + $0x4] sm:$0xf]
        %v475 = vld [vmem:[%s3 + $0x8] sm:$0xf]
        %v476 = vld [vmem:[%s3 + $0xc] sm:$0xf]
        %v477 = vld [vmem:[%s3 + $0x10] sm:$0xf]
        %v478 = vld [vmem:[%s3 + $0x14] sm:$0xf]
        %v479 = vld [vmem:[%s3 + $0x18] sm:$0xf]
        %v480 = vld [vmem:[%s3 + $0x1c] sm:$0xf]
        %v481 = vld [vmem:[%s3 + $0x20] sm:$0xf]
        %v482 = vld [vmem:[%s3 + $0x24] sm:$0xf]
        %v483 = vld [vmem:[%s3 + $0x28] sm:$0xf]
        %v484 = vld [vmem:[%s3 + $0x2c] sm:$0xf]
        %v485 = vld [vmem:[%s3 + $0x30] sm:$0xf]
        %v486 = vld [vmem:[%s3 + $0x34] sm:$0xf]
        %v487 = vld [vmem:[%s3 + $0x38] sm:$0xf]
        %v488 = vld [vmem:[%s3 + $0x3c] sm:$0xf]
        %v489 = vld [vmem:[%s3 + $0x40] sm:$0xf]
        %v490 = vld [vmem:[%s3 + $0x44] sm:$0xf]
        %v491 = vld [vmem:[%s3 + $0x48] sm:$0xf]
        %v492 = vld [vmem:[%s3 + $0x4c] sm:$0xf]
        %v493 = vld [vmem:[%s3 + $0x50] sm:$0xf]
        %v494 = vld [vmem:[%s3 + $0x54] sm:$0xf]
        %v495 = vld [vmem:[%s3 + $0x58] sm:$0xf]
        %v496 = vld [vmem:[%s3 + $0x5c] sm:$0xf]
        %v497 = vld [vmem:[%s3 + $0x60] sm:$0xf]
        %v498 = vld [vmem:[%s3 + $0x64] sm:$0xf]
        %v499 = vld [vmem:[%s3 + $0x68] sm:$0xf]
        %v500 = vld [vmem:[%s3 + $0x6c] sm:$0xf]
        %v501 = vld [vmem:[%s3 + $0x70] sm:$0xf]
        %v502 = vld [vmem:[%s3 + $0x74] sm:$0xf]
        %v503 = vld [vmem:[%s3 + $0x78] sm:$0xf]
        %v504 = vld [vmem:[%s3 + $0x7c] sm:$0xf]
        %v505 = vld [vmem:[%s3 + $0x80] sm:$0xf]
        %v506 = vld [vmem:[%s3 + $0x84] sm:$0xf]
        %v507 = vld [vmem:[%s3 + $0x88] sm:$0xf]
        %v508 = vld [vmem:[%s3 + $0x8c] sm:$0xf]
        %v513 = vunpack.c.l.b16 %v461
        %v514 = vunpack.c.l.b16 %v462
        %v515 = vunpack.c.l.b16 %v463
        %v516 = vunpack.c.l.b16 %v464
        %v517 = vpack.c.b16 %v513, %v513
        %v518 = vpack.c.b16 %v514, %v514
        %v519 = vpack.c.b16 %v515, %v515
        %v520 = vpack.c.b16 %v516, %v516
        %521 = vrot.lane.b32.xlu0 %v517, 32
        %v522 = vpop.permute.xlu0 %521
        %523 = vrot.lane.b32.xlu0 %v518, 32
        %v524 = vpop.permute.xlu0 %523
        %525 = vrot.lane.b32.xlu0 %v519, 32
        %v526 = vpop.permute.xlu0 %525
        %527 = vrot.lane.b32.xlu0 %v520, 32
        %v528 = vpop.permute.xlu0 %527
        %v533 = vunpack.c.l.b16 %v467
        %v534 = vunpack.c.l.b16 %v468
        %v535 = vunpack.c.l.b16 %v469
        %v536 = vunpack.c.l.b16 %v470
        %v537 = vpack.c.b16 %v533, %v533
        %v538 = vpack.c.b16 %v534, %v534
        %v539 = vpack.c.b16 %v535, %v535
        %v540 = vpack.c.b16 %v536, %v536
        %541 = vrot.lane.b32.xlu0 %v537, 64
        %v542 = vpop.permute.xlu0 %541
        %543 = vrot.lane.b32.xlu0 %v538, 64
        %v544 = vpop.permute.xlu0 %543
        %545 = vrot.lane.b32.xlu0 %v539, 64
        %v546 = vpop.permute.xlu0 %545
        %547 = vrot.lane.b32.xlu0 %v540, 64
        %v548 = vpop.permute.xlu0 %547
        %vm549 = vcmask 261120
        %v552 = vsel %vm549, %v455, %v522
        %v555 = vsel %vm549, %v456, %v524
        %v558 = vsel %vm549, %v457, %v526
        %v561 = vsel %vm549, %v458, %v528
        %vm562 = vcmask 523264
        %v564 = vsel %vm562, %v552, %v542
        %v566 = vsel %vm562, %v555, %v544
        %v568 = vsel %vm562, %v558, %v546
        %v570 = vsel %vm562, %v561, %v548
        %v572 = vunpack.c.l.b16 %v465
        %v573 = vpack.c.b16 %v572, %v572
        %574 = vrot.lane.b32.xlu0 %v573, 32
        %v575 = vpop.permute.xlu0 %574
        %v577 = vunpack.c.l.b16 %v471
        %v578 = vpack.c.b16 %v577, %v577
        %579 = vrot.lane.b32.xlu0 %v578, 64
        %v580 = vpop.permute.xlu0 %579
        %v583 = vsel %vm549, %v459, %v575
        %v585 = vsel %vm562, %v583, %v580
        %v590 = vunpack.c.l.b16 %v566
        %v591 = vunpack.c.l.b16 %v568
        %v592 = vunpack.c.l.b16 %v570
        %v593 = vunpack.c.l.b16 %v585
        %v594 = vpack.c.b16 %v591, %v590
        %v595 = vpack.c.b16 %v593, %v592
        %v608 = vunpack.c.l.b16 %v485
        %v609 = vunpack.c.l.b16 %v486
        %v610 = vunpack.c.l.b16 %v487
        %v611 = vunpack.c.l.b16 %v488
        %v612 = vunpack.c.l.b16 %v489
        %v613 = vunpack.c.l.b16 %v490
        %v614 = vunpack.c.l.b16 %v491
        %v615 = vunpack.c.l.b16 %v492
        %v616 = vunpack.c.l.b16 %v493
        %v617 = vunpack.c.l.b16 %v494
        %v618 = vunpack.c.l.b16 %v495
        %v619 = vunpack.c.l.b16 %v496
        %v620 = vpack.c.b16 %v609, %v608
        %v621 = vpack.c.b16 %v611, %v610
        %v622 = vpack.c.b16 %v613, %v612
        %v623 = vpack.c.b16 %v615, %v614
        %v624 = vpack.c.b16 %v617, %v616
        %v625 = vpack.c.b16 %v619, %v618
        %vm632 = vcmask 785408
        %v634 = vsel %vm632, %v594, 0
        %v637 = vsel %vm632, %v595, 0
        %639 = vmatpush.bf16.msra.mxu0 0
        %640 = vmatpush.bf16.msra.mxu0 0
        %641 = vmatpush.bf16.msra.mxu0 %v625
        %642 = vmatpush.bf16.msra.mxu0 %v624
        %643 = vmatpush.bf16.msra.mxu0 %v623
        %644 = vmatpush.bf16.msra.mxu0 %v622
        %645 = vmatpush.bf16.msra.mxu0 %v621
        %646 = vmatpush.bf16.msra.mxu0 %v620
        %647 = vmatmul.bf16.gmra.mxu0 %v634
        %v648 = vpop.f32.mrf.mxu0
        %v649 = vadd.f32 0.0, %v648
        %v650 = vpop.f32.mrf.mxu0
        %v651 = vadd.f32 0.0, %v650
        %652 = vmatmul.bf16.gmra.mxu0 %v637
        %v653 = vpop.f32.mrf.mxu0
        %v654 = vadd.f32 0.0, %v653
        %v655 = vpop.f32.mrf.mxu0
        %v656 = vadd.f32 0.0, %v655
        %657 = vdwg.mxu0
        %v659 = vunpack.c.l.b16 %v564
        %v660 = vpack.c.b16 %v590, %v659
        %v661 = vpack.c.b16 %v592, %v591
        %v674 = vunpack.c.l.b16 %v473
        %v675 = vunpack.c.l.b16 %v474
        %v676 = vunpack.c.l.b16 %v475
        %v677 = vunpack.c.l.b16 %v476
        %v678 = vunpack.c.l.b16 %v477
        %v679 = vunpack.c.l.b16 %v478
        %v680 = vunpack.c.l.b16 %v479
        %v681 = vunpack.c.l.b16 %v480
        %v682 = vunpack.c.l.b16 %v481
        %v683 = vunpack.c.l.b16 %v482
        %v684 = vunpack.c.l.b16 %v483
        %v685 = vunpack.c.l.b16 %v484
        %v686 = vpack.c.b16 %v675, %v674
        %v687 = vpack.c.b16 %v677, %v676
        %v688 = vpack.c.b16 %v679, %v678
        %v689 = vpack.c.b16 %v681, %v680
        %v690 = vpack.c.b16 %v683, %v682
        %v691 = vpack.c.b16 %v685, %v684
        %v699 = vsel %vm632, %v660, 0
        %v702 = vsel %vm632, %v661, 0
        %704 = vmatpush.bf16.msra.mxu0 0
        %705 = vmatpush.bf16.msra.mxu0 0
        %706 = vmatpush.bf16.msra.mxu0 %v691
        %707 = vmatpush.bf16.msra.mxu0 %v690
        %708 = vmatpush.bf16.msra.mxu0 %v689
        %709 = vmatpush.bf16.msra.mxu0 %v688
        %710 = vmatpush.bf16.msra.mxu0 %v687
        %711 = vmatpush.bf16.msra.mxu0 %v686
        %712 = vmatmul.bf16.gmra.mxu0 %v699
        %v713 = vpop.f32.mrf.mxu0
        %v714 = vadd.f32 %v649, %v713
        %v715 = vpop.f32.mrf.mxu0
        %v716 = vadd.f32 %v651, %v715
        %717 = vmatmul.bf16.gmra.mxu0 %v702
        %v718 = vpop.f32.mrf.mxu0
        %v719 = vadd.f32 %v654, %v718
        %v720 = vpop.f32.mrf.mxu0
        %v721 = vadd.f32 %v656, %v720
        %722 = vdwg.mxu0
        %v724 = vunpack.c.l.b16 %v466
        %v725 = vpack.c.b16 %v724, %v724
        %726 = vrot.lane.b32.xlu0 %v725, 32
        %v727 = vpop.permute.xlu0 %726
        %v729 = vunpack.c.l.b16 %v472
        %v730 = vpack.c.b16 %v729, %v729
        %731 = vrot.lane.b32.xlu0 %v730, 64
        %v732 = vpop.permute.xlu0 %731
        %v735 = vsel %vm549, %v460, %v727
        %v737 = vsel %vm562, %v735, %v732
        %v739 = vunpack.c.l.b16 %v737
        %v740 = vpack.c.b16 %v739, %v593
        %v753 = vunpack.c.l.b16 %v497
        %v754 = vunpack.c.l.b16 %v498
        %v755 = vunpack.c.l.b16 %v499
        %v756 = vunpack.c.l.b16 %v500
        %v757 = vunpack.c.l.b16 %v501
        %v758 = vunpack.c.l.b16 %v502
        %v759 = vunpack.c.l.b16 %v503
        %v760 = vunpack.c.l.b16 %v504
        %v761 = vunpack.c.l.b16 %v505
        %v762 = vunpack.c.l.b16 %v506
        %v763 = vunpack.c.l.b16 %v507
        %v764 = vunpack.c.l.b16 %v508
        %v765 = vpack.c.b16 %v754, %v753
        %v766 = vpack.c.b16 %v756, %v755
        %v767 = vpack.c.b16 %v758, %v757
        %v768 = vpack.c.b16 %v760, %v759
        %v769 = vpack.c.b16 %v762, %v761
        %v770 = vpack.c.b16 %v764, %v763
        %v778 = vsel %vm632, %v740, 0
        %780 = vmatpush.bf16.msra.mxu0 0
        %781 = vmatpush.bf16.msra.mxu0 0
        %782 = vmatpush.bf16.msra.mxu0 %v770
        %783 = vmatpush.bf16.msra.mxu0 %v769
        %784 = vmatpush.bf16.msra.mxu0 %v768
        %785 = vmatpush.bf16.msra.mxu0 %v767
        %786 = vmatpush.bf16.msra.mxu0 %v766
        %787 = vmatpush.bf16.msra.mxu0 %v765
        %788 = vmatmul.bf16.gmra.mxu0 %v702
        %v789 = vpop.f32.mrf.mxu0
        %v790 = vadd.f32 0.0, %v789
        %v791 = vpop.f32.mrf.mxu0
        %v792 = vadd.f32 0.0, %v791
        %793 = vmatmul.bf16.gmra.mxu0 %v778
        %v794 = vpop.f32.mrf.mxu0
        %v795 = vadd.f32 0.0, %v794
        %v796 = vpop.f32.mrf.mxu0
        %v797 = vadd.f32 0.0, %v796
        %798 = vdwg.mxu0
        %v799 = vadd.f32 %v714, %v790
        %v800 = vadd.f32 %v716, %v792
        %v801 = vadd.f32 %v719, %v795
        %v802 = vadd.f32 %v721, %v797
        %v803 = vld [vmem:[%s4] sm:$0x1]
        %v805 = vperm.slane %v803, 0
        %v807 = vadd.f32 %v799, %v805
        %v808 = vadd.f32 %v800, %v805
        %v809 = vadd.f32 %v801, %v805
        %v810 = vadd.f32 %v802, %v805
        %v811 = vmax.f32 %v807, 0.0
        %v812 = vmax.f32 %v808, 0.0
        %v813 = vmax.f32 %v809, 0.0
        %v814 = vmax.f32 %v810, 0.0
        %v815 = vpack.c.bf16 %v812, %v811
        %v816 = vpack.c.bf16 %v814, %v813
        %v817 = vld [vmem:[%s5] sm:$0xf]
        %v818 = vld [vmem:[%s5 + $0x4] sm:$0xf]
        %v819 = vld [vmem:[%s5 + $0x8] sm:$0xf]
        %v820 = vld [vmem:[%s5 + $0xc] sm:$0xf]
        %v821 = vld [vmem:[%s6] sm:$0x1]
        %v823 = vperm.slane %v821, 0
        %v829 = vunpack.c.l.b16 %v817
        %v830 = vunpack.c.l.b16 %v818
        %v831 = vunpack.c.l.b16 %v819
        %v832 = vunpack.c.l.b16 %v820
        %v833 = vpack.c.b16 %v830, %v829
        %v834 = vpack.c.b16 %v832, %v831
        %v838 = vsel %vm549, %v815, 0
        %v841 = vsel %vm549, %v816, 0
        %843 = vmatpush.bf16.msra.mxu0 0
        %844 = vmatpush.bf16.msra.mxu0 0
        %845 = vmatpush.bf16.msra.mxu0 0
        %846 = vmatpush.bf16.msra.mxu0 0
        %847 = vmatpush.bf16.msra.mxu0 0
        %848 = vmatpush.bf16.msra.mxu0 0
        %849 = vmatpush.bf16.msra.mxu0 %v834
        %850 = vmatpush.bf16.msra.mxu0 %v833
        %851 = vmatmul.bf16.gmra.mxu0 %v838
        %v852 = vpop.f32.mrf.mxu0
        %v853 = vadd.f32 %v823, %v852
        %v854 = vpop.f32.mrf.mxu0
        %v855 = vadd.f32 %v823, %v854
        %856 = vmatmul.bf16.gmra.mxu0 %v841
        %v857 = vpop.f32.mrf.mxu0
        %v858 = vadd.f32 %v823, %v857
        %v859 = vpop.f32.mrf.mxu0
        %v860 = vadd.f32 %v823, %v859
        %861 = vdwg.mxu0
        %v862 = vadd.f32 %v853, %v305
        %v863 = vadd.f32 %v855, %v306
        %v864 = vadd.f32 %v858, %v307
        %v865 = vadd.f32 %v860, %v308
        %v866 = vmax.f32 %v862, 0.0
        %v867 = vmax.f32 %v863, 0.0
        %v868 = vmax.f32 %v864, 0.0
        %v869 = vmax.f32 %v865, 0.0
        %v870 = vpack.c.bf16 %v866, %v866
        %v871 = vpack.c.bf16 %v867, %v867
        %v872 = vpack.c.bf16 %v868, %v868
        %v873 = vpack.c.bf16 %v869, %v869
        %874 = vst [vmem:[%s285] sm:$0xf] %v870
        %875 = vst [vmem:[%s285 + $0x4] sm:$0xf] %v871
        %876 = vst [vmem:[%s285 + $0x8] sm:$0xf] %v872
        %877 = vst [vmem:[%s285 + $0xc] sm:$0xf] %v873
        %s878 = sand.u32 %s195, 1
        %s879 = scalar_lea.sflag [#allocation3], %s878
        %s880 = sand.u32 %s195, 1
        %s881 = smul.addr %s880, 16
        %s882 = scalar_lea.vmem [#allocation2], %s881
        // Predicated region
        $region49: #{_bottleneck_forward_nchw.1} parent=47 // pred_check
          %p883 = pneg %p205
        $region50: #{_bottleneck_forward_nchw.1} parent=47 // pred_check_branch
          %885 = sbr.rel (%p883) target = $region52
        $region51: #{_bottleneck_forward_nchw.1} parent=47 // pred_region
          %s886 = smul.u32 4, %s26
          %888 = vsyncadd %s879, 0
          %s889 = smul.addr %s25, 8
          %s890 = sadd.s32 %s886, %s889
          %s891 = smul.addr %s890, 4
          %s892 = scalar_lea.hbm %s7, %s891
          %s893 = sshll.u32 %s882, 4
          %s894 = int_to_ptr.vmem [resolvable:$true] %s893
          %s895 = sshll.u32 %s892, 4
          %s896 = int_to_ptr.hbm [resolvable:$true] %s895
          %901 = dma.vmem_to_hbm [thread:$0]  %s894, 256, %s896, %s879, 64, 64, 4
        $region52: #{_bottleneck_forward_nchw.1} parent=47 // pred_fallthru
          _
      $region48: #{_bottleneck_forward_nchw.1} parent=5 // pred_fallthru
        _
      %p902 = scmp.le.s32.totalorder 2, %s16
      // Predicated region
      $region53: #{_bottleneck_forward_nchw.1} parent=5 // pred_check
        %p903 = pneg %p902
      $region54: #{_bottleneck_forward_nchw.1} parent=5 // pred_check_branch
        %905 = sbr.rel (%p903) target = $region56
      $region55: #{_bottleneck_forward_nchw.1} parent=5 // pred_region
        %s906 = ssub.s32 %s16, 2
        // Predicated region
        $region57: #{_bottleneck_forward_nchw.1} parent=55 // pred_check
          %p907 = pneg %p211
        $region58: #{_bottleneck_forward_nchw.1} parent=55 // pred_check_branch
          %909 = sbr.rel (%p907) target = $region60
        $region59: #{_bottleneck_forward_nchw.1} parent=55 // pred_region
          %s910 = sand.u32 %s196, 1
          %s911 = scalar_lea.sflag [#allocation3], %s910
          %s912 = sand.u32 %s196, 1
          %s913 = smul.addr %s912, 16
          %s914 = scalar_lea.vmem [#allocation2], %s913
          %916 = dma.done %s911, 256
        $region60: #{_bottleneck_forward_nchw.1} parent=55 // pred_fallthru
          _
      $region56: #{_bottleneck_forward_nchw.1} parent=5 // pred_fallthru
        _
    $region6: #{_bottleneck_forward_nchw.1} parent=1 // loop_footer
      %s20 = sadd.s32 1, %s16
    $region7: #{_bottleneck_forward_nchw.1} parent=1 // loop_footer_branch
      %15 = sbr.rel target = $region3
    $region8: #{_bottleneck_forward_nchw.1} parent=1 // loop_exit
      _
    %917 = vsyncpa [#allocation3], 1
    %s918 = scalar_lea.sflag [#allocation3], 1
    %919 = vsyncpa %s918, 1

</llo_original>
